<compile_context>
chip_gen: v7x
topology: tpu7x:2x2x1
jax: 0.10.0
libtpu: 0.0.40
codegen_flags: <defaults>
</compile_context>

<pallas_src>
import functools

import jax
import jax.numpy as jnp
from jax import lax
from jax.experimental import pallas as pl
from jax.experimental.pallas import tpu as pltpu


# Below v7x's 64 MiB physical VMEM, above the 16/32 MiB scoped defaults.
_VMEM_LIMIT = 48 * 1024 * 1024


def _pick_tile(ns):
    """Largest MXU-friendly tile (multiple of 128, preferring 512/256) dividing ns."""
    for t in (512, 256, 128):
        if ns >= t and ns % t == 0:
            return t
    return ns  # small Ns: full extent (allowed when block dim == array dim)


def _keys_kernel(x_ref, w_ref, b_ref, keys_ref):
    """Fused phi/g 1x1 convs + 2x2 max-pool for one pooled-position slab.

    x_ref:    (1, 4, C, TS)  f32  window-element-major activation slab
    w_ref:    (2*Ci, C)      bf16 concat(phi, g) 1x1-conv weight
    b_ref:    (2*Ci, 1)      f32
    keys_ref: (1, 2*Ci, TS)  bf16 pooled phi/g, lane-dense over Ns
    """
    w = w_ref[...]
    p = None
    # The 4 window elements are separate sublane slabs -> aligned vector loads.
    # max(conv(x)) + b == max(conv(x) + b) for a per-channel bias.
    for j in range(4):
        pj = jnp.dot(w, x_ref[0, j].astype(jnp.bfloat16),
                     preferred_element_type=jnp.float32)
        p = pj if p is None else jnp.maximum(p, pj)
    keys_ref[0] = (p + b_ref[...]).astype(keys_ref.dtype)


def _attn_kernel(ci, x_ref, keys_ref, wt_ref, bt_ref, wo_ref, bo_ref, out_ref):
    """Attention + W-conv + residual for one (C, TQ) query slab.

    x_ref:    (1, 1, C, TQ)   f32  query-slab activation (also the residual)
    keys_ref: (1, 2*Ci, Ns)   bf16 pooled phi (rows [0,Ci)) and g (rows [Ci,2Ci))
    wt_ref:   (Ci, C) bf16, bt_ref: (Ci, 1) f32   theta 1x1 conv
    wo_ref:   (C, Ci) bf16, bo_ref: (C, 1)  f32   W conv with folded eval-mode BN
    out_ref:  (1, 1, C, TQ)  original dtype
    """
    x = x_ref[0, 0]                       # (C, TQ) f32 — kept f32 for exact residual
    x_bf = x.astype(jnp.bfloat16)

    # theta 1x1 conv for this query tile (bf16 MXU operands, f32 accumulation)
    theta = (jnp.dot(wt_ref[...], x_bf, preferred_element_type=jnp.float32)
             + bt_ref[...]).astype(jnp.bfloat16)                 # (Ci, TQ)

    phi_p = keys_ref[0, 0:ci, :]          # (Ci, Ns) bf16
    g_p = keys_ref[0, ci:2 * ci, :]       # (Ci, Ns) bf16

    # Transposed attention logits: (Ns, TQ).  Contraction on dim 0 of both
    # operands -> only the small (Ci, Ns) operand may need an XLU transpose; the
    # large N-sized tensors stay lane-dense end-to-end.
    f_t = lax.dot_general(phi_p, theta,
                          dimension_numbers=(((0,), (0,)), ((), ())),
                          preferred_element_type=jnp.float32)

    # Numerically-stable softmax over keys (sublane axis).  exp kept f32 (v5e EUP
    # has no bf16 path); reciprocal goes to the EUP slot.
    m = jnp.max(f_t, axis=0, keepdims=True)
    e = jnp.exp(f_t - m)
    s = jnp.sum(e, axis=0, keepdims=True)
    attn_t = (e * pl.reciprocal(s, approx=True)).astype(jnp.bfloat16)   # (Ns, TQ)

    # y = g_pool @ attn^T : (Ci, TQ) — plain (M,K)@(K,N), no N-sized transpose.
    y = jnp.dot(g_p, attn_t, preferred_element_type=jnp.float32).astype(jnp.bfloat16)

    # W 1x1 conv (folded eval-mode BN) + residual in f32; one lane-dense store.
    out = (jnp.dot(wo_ref[...], y, preferred_element_type=jnp.float32)
           + bo_ref[...] + x)
    out_ref[0, 0] = out.astype(out_ref.dtype)


def sa_forward(x_nchw, params):
    B, C, H, W = x_nchw.shape
    assert H % 2 == 0 and W % 2 == 0, "MaxPool2d(2) path assumes even H, W"
    Ci = params['w_theta'].shape[1]
    Hs, Ws = H // 2, W // 2
    Ns = Hs * Ws

    # ---- parameter fusion (wrapper-side; bf16 weights, DMA'd once) ----
    w_pg = jnp.concatenate([params['w_phi'], params['w_g']],
                           axis=1).T.astype(jnp.bfloat16)                    # (2Ci, C)
    b_pg = jnp.concatenate([params['b_phi'], params['b_g']],
                           axis=1).reshape(2 * Ci, 1).astype(jnp.float32)
    w_th = params['w_theta'].T.astype(jnp.bfloat16)                          # (Ci, C)
    b_th = params['b_theta'].reshape(Ci, 1).astype(jnp.float32)
    # fold eval-mode BatchNorm into the W conv
    w_out = (params['w_W'] * params['bn_scale']).T.astype(jnp.bfloat16)      # (C, Ci)
    b_out = (params['b_W'] * params['bn_scale']
             + params['bn_shift']).reshape(C, 1).astype(jnp.float32)

    # ---- single window-element-major copy of the activation: (B, 4, C, Ns) ----
    x_w = x_nchw.reshape(B, C, Hs, 2, Ws, 2)
    x_w = jnp.transpose(x_w, (0, 3, 5, 1, 2, 4)).reshape(B, 4, C, Ns)

    # ---- kernel 1: pooled phi/g keys/values, (B, 2Ci, Ns) bf16 ----
    ts = _pick_tile(Ns)
    keys = pl.pallas_call(
        _keys_kernel,
        out_shape=jax.ShapeDtypeStruct((B, 2 * Ci, Ns), jnp.bfloat16),
        grid=(B, Ns // ts),
        in_specs=[
            pl.BlockSpec((1, 4, C, ts), lambda b, s: (b, 0, 0, s)),
            pl.BlockSpec((2 * Ci, C), lambda b, s: (0, 0)),
            pl.BlockSpec((2 * Ci, 1), lambda b, s: (0, 0)),
        ],
        out_specs=pl.BlockSpec((1, 2 * Ci, ts), lambda b, s: (b, 0, s)),
        compiler_params=pltpu.CompilerParams(
            dimension_semantics=("parallel", "parallel"),
            vmem_limit_bytes=_VMEM_LIMIT),
    )(x_w, w_pg, b_pg)

    # ---- kernel 2: query-tiled attention + W conv + residual ----
    tq = _pick_tile(Ns)
    out_w = pl.pallas_call(
        functools.partial(_attn_kernel, Ci),
        out_shape=jax.ShapeDtypeStruct((B, 4, C, Ns), x_nchw.dtype),
        grid=(B, 4, Ns // tq),
        in_specs=[
            pl.BlockSpec((1, 1, C, tq), lambda b, j, s: (b, j, 0, s)),
            pl.BlockSpec((1, 2 * Ci, Ns), lambda b, j, s: (b, 0, 0)),
            pl.BlockSpec((Ci, C), lambda b, j, s: (0, 0)),
            pl.BlockSpec((Ci, 1), lambda b, j, s: (0, 0)),
            pl.BlockSpec((C, Ci), lambda b, j, s: (0, 0)),
            pl.BlockSpec((C, 1), lambda b, j, s: (0, 0)),
        ],
        out_specs=pl.BlockSpec((1, 1, C, tq), lambda b, j, s: (b, j, 0, s)),
        compiler_params=pltpu.CompilerParams(
            dimension_semantics=("parallel", "parallel", "parallel"),
            vmem_limit_bytes=_VMEM_LIMIT),
    )(x_w, keys, w_th, b_th, w_out, b_out)

    # un-permute back to NCHW (pure layout glue)
    z = out_w.reshape(B, 2, 2, C, Hs, Ws)
    z = jnp.transpose(z, (0, 3, 4, 1, 5, 2)).reshape(B, C, H, W)
    return z


def sa_ref(x_nchw, params):
    """Pure-JAX reference (NCHW, mirrors the PyTorch forward). High precision."""
    HI = jax.lax.Precision.HIGHEST
    B, C, H, W = x_nchw.shape

    def conv1x1(x, w, b):   # w: (C_in, C_out), b: (1, C_out)
        return jnp.einsum('bchw,cd->bdhw', x, w, precision=HI) + b.reshape(1, -1, 1, 1)

    def maxpool2(x):
        b_, c_, h_, w_ = x.shape
        return x.reshape(b_, c_, h_ // 2, 2, w_ // 2, 2).max(axis=(3, 5))

    theta = conv1x1(x_nchw, params['w_theta'], params['b_theta'])
    phi = maxpool2(conv1x1(x_nchw, params['w_phi'], params['b_phi']))
    g = maxpool2(conv1x1(x_nchw, params['w_g'], params['b_g']))
    Ci = theta.shape[1]
    theta_x = theta.reshape(B, Ci, -1).transpose(0, 2, 1)
    phi_x = phi.reshape(B, Ci, -1)
    g_x = g.reshape(B, Ci, -1).transpose(0, 2, 1)
    f = jnp.einsum('bnc,bcm->bnm', theta_x, phi_x, precision=HI)
    f = jax.nn.softmax(f, axis=-1)
    y = jnp.einsum('bnm,bmc->bnc', f, g_x, precision=HI)
    y = y.transpose(0, 2, 1).reshape(B, Ci, H, W)
    w_y = conv1x1(y, params['w_W'], params['b_W'])
    w_y = (w_y * params['bn_scale'].reshape(1, -1, 1, 1)
           + params['bn_shift'].reshape(1, -1, 1, 1))
    return w_y + x_nchw


if __name__ == "__main__":
    B, C, H, W = 2, 8, 16, 16
    Ci = C // 2

    key = jax.random.PRNGKey(0)
    keys = jax.random.split(key, 9)
    x = jax.random.normal(keys[0], (B, C, H, W), jnp.float32)

    def uinit(k, shape, fan_in):
        bound = 1.0 / float(fan_in) ** 0.5
        return jax.random.uniform(k, shape, jnp.float32, -bound, bound)

    params = {
        'w_theta': uinit(keys[1], (C, Ci), C), 'b_theta': uinit(keys[2], (1, Ci), C),
        'w_phi':   uinit(keys[3], (C, Ci), C), 'b_phi':   uinit(keys[4], (1, Ci), C),
        'w_g':     uinit(keys[5], (C, Ci), C), 'b_g':     uinit(keys[6], (1, Ci), C),
        'w_W':     uinit(keys[7], (Ci, C), Ci), 'b_W':    uinit(keys[8], (1, C), Ci),
        # BatchNorm2d with weight=0, bias=0 (as in the module), eval-mode fold:
        # scale = gamma / sqrt(running_var + eps) = 0 ; shift = beta - mean*scale = 0
        'bn_scale': jnp.zeros((1, C), jnp.float32),
        'bn_shift': jnp.zeros((1, C), jnp.float32),
    }

    # bf16 MXU operands with f32 accumulation -> slightly looser tolerance than f32.
    z = jax.block_until_ready(sa_forward(x, params))
    assert z.shape == x.shape and z.dtype == x.dtype
    assert jnp.allclose(z, sa_ref(x, params), atol=3e-2, rtol=3e-2)

    # non-degenerate BN affine so the whole attention path is exercised numerically
    dbg = dict(params,
               bn_scale=jnp.ones((1, C), jnp.float32),
               bn_shift=0.1 * jnp.ones((1, C), jnp.float32))
    z_dbg = jax.block_until_ready(sa_forward(x, dbg))
    assert jnp.allclose(z_dbg, sa_ref(x, dbg), atol=3e-2, rtol=3e-2)

    print("KERNEL_OK")
</pallas_src>

<mosaic_0001>
module attributes {stable_mosaic.version = 11 : i64} {
  func.func @_keys_kernel(%arg0: i32, %arg1: i32, %arg2: memref<1x4x8x64xf32, #tpu.memory_space<vmem>>, %arg3: memref<8x8xbf16, #tpu.memory_space<vmem>>, %arg4: memref<8x1xf32, #tpu.memory_space<vmem>>, %arg5: memref<1x8x64xbf16, #tpu.memory_space<vmem>>) attributes {dimension_semantics = [#tpu.dimension_semantics<parallel>, #tpu.dimension_semantics<parallel>], iteration_bounds = array<i64: 2, 1>, scalar_prefetch = 0 : i64, scratch_operands = 0 : i64, tpu.core_type = #tpu.core_type<tc>, window_params = [{transform_indices = @transform_0, window_bounds = array<i64: 1, 4, 8, 64>}, {pipeline_mode = #tpu.pipeline_mode<synchronous>, transform_indices = @transform_1, window_bounds = array<i64: 8, 8>}, {pipeline_mode = #tpu.pipeline_mode<synchronous>, transform_indices = @transform_2, window_bounds = array<i64: 8, 1>}, {transform_indices = @transform_3, window_bounds = array<i64: 1, 8, 64>}]} {
    %c0 = arith.constant 0 : index
    %c0_0 = arith.constant 0 : index
    %0 = vector.load %arg3[%c0, %c0_0] : memref<8x8xbf16, #tpu.memory_space<vmem>>, vector<8x8xbf16>
    %c0_1 = arith.constant 0 : index
    %c0_2 = arith.constant 0 : index
    %c0_3 = arith.constant 0 : index
    %c0_4 = arith.constant 0 : index
    %1 = vector.load %arg2[%c0_1, %c0_2, %c0_3, %c0_4] : memref<1x4x8x64xf32, #tpu.memory_space<vmem>>, vector<1x1x8x64xf32>
    %2 = vector.shape_cast %1 : vector<1x1x8x64xf32> to vector<8x64xf32>
    %3 = arith.truncf %2 : vector<8x64xf32> to vector<8x64xbf16>
    %cst = arith.constant dense<0.000000e+00> : vector<8x64xf32>
    %4 = tpu.matmul %0, %3, %cst {dimension_numbers = #tpu.dot_dimension_numbers<[1], [0], [0], [1], [0, 0, 1, 1], [], []>} : vector<8x8xbf16>, vector<8x64xbf16>, vector<8x64xf32> -> vector<8x64xf32>
    %c0_5 = arith.constant 0 : index
    %c1 = arith.constant 1 : index
    %c0_6 = arith.constant 0 : index
    %c0_7 = arith.constant 0 : index
    %5 = vector.load %arg2[%c0_5, %c1, %c0_6, %c0_7] : memref<1x4x8x64xf32, #tpu.memory_space<vmem>>, vector<1x1x8x64xf32>
    %6 = vector.shape_cast %5 : vector<1x1x8x64xf32> to vector<8x64xf32>
    %7 = arith.truncf %6 : vector<8x64xf32> to vector<8x64xbf16>
    %cst_8 = arith.constant dense<0.000000e+00> : vector<8x64xf32>
    %8 = tpu.matmul %0, %7, %cst_8 {dimension_numbers = #tpu.dot_dimension_numbers<[1], [0], [0], [1], [0, 0, 1, 1], [], []>} : vector<8x8xbf16>, vector<8x64xbf16>, vector<8x64xf32> -> vector<8x64xf32>
    %9 = arith.maximumf %4, %8 : vector<8x64xf32>
    %c0_9 = arith.constant 0 : index
    %c2 = arith.constant 2 : index
    %c0_10 = arith.constant 0 : index
    %c0_11 = arith.constant 0 : index
    %10 = vector.load %arg2[%c0_9, %c2, %c0_10, %c0_11] : memref<1x4x8x64xf32, #tpu.memory_space<vmem>>, vector<1x1x8x64xf32>
    %11 = vector.shape_cast %10 : vector<1x1x8x64xf32> to vector<8x64xf32>
    %12 = arith.truncf %11 : vector<8x64xf32> to vector<8x64xbf16>
    %cst_12 = arith.constant dense<0.000000e+00> : vector<8x64xf32>
    %13 = tpu.matmul %0, %12, %cst_12 {dimension_numbers = #tpu.dot_dimension_numbers<[1], [0], [0], [1], [0, 0, 1, 1], [], []>} : vector<8x8xbf16>, vector<8x64xbf16>, vector<8x64xf32> -> vector<8x64xf32>
    %14 = arith.maximumf %9, %13 : vector<8x64xf32>
    %c0_13 = arith.constant 0 : index
    %c3 = arith.constant 3 : index
    %c0_14 = arith.constant 0 : index
    %c0_15 = arith.constant 0 : index
    %15 = vector.load %arg2[%c0_13, %c3, %c0_14, %c0_15] : memref<1x4x8x64xf32, #tpu.memory_space<vmem>>, vector<1x1x8x64xf32>
    %16 = vector.shape_cast %15 : vector<1x1x8x64xf32> to vector<8x64xf32>
    %17 = arith.truncf %16 : vector<8x64xf32> to vector<8x64xbf16>
    %cst_16 = arith.constant dense<0.000000e+00> : vector<8x64xf32>
    %18 = tpu.matmul %0, %17, %cst_16 {dimension_numbers = #tpu.dot_dimension_numbers<[1], [0], [0], [1], [0, 0, 1, 1], [], []>} : vector<8x8xbf16>, vector<8x64xbf16>, vector<8x64xf32> -> vector<8x64xf32>
    %19 = arith.maximumf %14, %18 : vector<8x64xf32>
    %c0_17 = arith.constant 0 : index
    %c0_18 = arith.constant 0 : index
    %20 = vector.load %arg4[%c0_17, %c0_18] : memref<8x1xf32, #tpu.memory_space<vmem>>, vector<8x1xf32>
    %21 = vector.broadcast %20 : vector<8x1xf32> to vector<8x64xf32>
    %22 = arith.addf %19, %21 : vector<8x64xf32>
    %23 = arith.truncf %22 : vector<8x64xf32> to vector<8x64xbf16>
    %c0_19 = arith.constant 0 : index
    %c0_20 = arith.constant 0 : index
    %c0_21 = arith.constant 0 : index
    %24 = vector.load %arg5[%c0_19, %c0_20, %c0_21] : memref<1x8x64xbf16, #tpu.memory_space<vmem>>, vector<1x8x64xbf16>
    %25 = vector.shape_cast %24 : vector<1x8x64xbf16> to vector<8x64xbf16>
    %26 = vector.shape_cast %23 : vector<8x64xbf16> to vector<1x8x64xbf16>
    tpu.vector_store %arg5[%c0_19, %c0_20, %c0_21], %26 {strides = array<i32>} : memref<1x8x64xbf16, #tpu.memory_space<vmem>>, vector<1x8x64xbf16>,
    return
  }
  func.func @transform_0(%arg0: i32, %arg1: i32) -> (i32, i32, i32, i32) {
    %c0_i32 = arith.constant 0 : i32
    %c0_i32_0 = arith.constant 0 : i32
    %c0_i32_1 = arith.constant 0 : i32
    return %arg0, %c0_i32, %c0_i32_0, %arg1 : i32, i32, i32, i32
  }
  func.func @transform_1(%arg0: i32, %arg1: i32) -> (i32, i32) {
    %c0_i32 = arith.constant 0 : i32
    %c0_i32_0 = arith.constant 0 : i32
    %c0_i32_1 = arith.constant 0 : i32
    return %c0_i32, %c0_i32_0 : i32, i32
  }
  func.func @transform_2(%arg0: i32, %arg1: i32) -> (i32, i32) {
    %c0_i32 = arith.constant 0 : i32
    %c0_i32_0 = arith.constant 0 : i32
    %c0_i32_1 = arith.constant 0 : i32
    return %c0_i32, %c0_i32_0 : i32, i32
  }
  func.func @transform_3(%arg0: i32, %arg1: i32) -> (i32, i32, i32) {
    %c0_i32 = arith.constant 0 : i32
    %c0_i32_0 = arith.constant 0 : i32
    return %arg0, %c0_i32, %arg1 : i32, i32, i32
  }
}

</mosaic_0001>

<llo_original>
// kernel: tpu_custom_call.1
$region0: #{tpu_custom_call.1}
  #allocation0 [shape = 'u32[]', space=smem, size = 0x4, offset = 0x4, fixed_abs, tag = 'smem constant byte address 0x4 - core index']
  #allocation1 [shape = 'u32[144,128]{1,0:T(1,128)}', space=vmem, size = 0x12000, scoped, tag = 'internal scratch']
  %s0 = inlined_call_operand.hbm [shape: f32[2,4,8,64], index: 0, kind: input, shape index: {}]
  %s1 = inlined_call_operand.vmem [shape: bf16[8,8], index: 1, kind: input, shape index: {}]
  %s2 = inlined_call_operand.vmem [shape: f32[8,1], index: 2, kind: input, shape index: {}]
  %s3 = inlined_call_operand.hbm [shape: bf16[2,8,64], index: 3, kind: output, shape index: {}]
  %s4 = sld [smem:[#allocation0]]
  $region49: #{tpu_custom_call.1} parent=0
    _
  %s6 = ssub.s32 1, %s4
  %s7 = scalar_select 0, %s6, %s4
  $region1: #{tpu_custom_call.1} parent=0
    #allocation2 [shape = 'u8[32768]{0}', space=vmem, size = 0x8000, scoped, tag = 'input window, operand 0']
    #allocation3 [shape = 's32[2]{0}', space=sflag, size = 0x8, scoped, tag = 'scoped memory for tpu_custom_call.1']
    #allocation4 [shape = 's32[2]{0}', space=sflag, size = 0x8, scoped, tag = 'scoped memory for tpu_custom_call.1']
    #allocation5 [shape = 'u8[4096]{0}', space=vmem, size = 0x1000, scoped, tag = 'output window, operand 0']
    %8 = vsyncpa [#allocation3], 0
    %s9 = scalar_lea.sflag [#allocation3], 1
    %10 = vsyncpa %s9, 0
    %11 = vsyncpa [#allocation4], 0
    %s12 = scalar_lea.sflag [#allocation4], 1
    %13 = vsyncpa %s12, 0
    loop: start=0, step=1, limit=4
    $region2: #{tpu_custom_call.1} parent=1 // loop_pre_header
      _
    $region3: #{tpu_custom_call.1} parent=1 // loop_header
      %s15 = sphi 0, %s19
      %p16 = scmp.ge.s32.totalorder %s15, 4
      %s22 = sphi 0, %s34
      %s23 = sphi 0, %s30
      %s24 = sphi 0, %s22
      %s25 = sphi 0, %s23
      %s26 = sphi 0, %s24
      %s27 = sphi 0, %s25
      %s39 = sphi 0, %s41
      %s42 = sphi 0, %s39
      %s43 = sphi 0, %s42
      %s59 = sphi 0, %s43
      %s63 = sphi 0, %s63
      %s65 = sphi 0, %s63
      %s66 = sphi 0, %s65
      %s80 = sphi 0, %s66
      %s84 = sphi 0, %s84
      %s86 = sphi 0, %s84
      %s87 = sphi 0, %s86
      %s101 = sphi 0, %s87
      %s109 = sphi 0, %s111
      %s112 = sphi 0, %s109
      %s113 = sphi 0, %s112
      %s129 = sphi 0, %s113
    $region4: #{tpu_custom_call.1} parent=1 // loop_header_branch
      %18 = sbr.rel (%p16) target = $region8
    $region5: #{tpu_custom_call.1} parent=1 // loop_body
      %s20 = ssub.s32 %s15, 1
      %s21 = ssub.s32 %s15, 2
      %s28 = sadd.s32 1, %s23
      %p29 = scmp.ge.s32.totalorder %s28, 1
      %s30 = scalar_select %p29, 0, %s28
      %s31 = sadd.s32 1, %s22
      %s32 = scalar_select %p29, %s31, %s22
      %p33 = scmp.ge.s32.totalorder %s32, 2
      %s34 = scalar_select %p33, 0, %s32
      %s35 = ssub.s32 %s22, %s34
      %s36 = ssub.s32 %s23, %s30
      %s37 = sor.u32 %s35, %s36
      %p38 = scmp.eq.s32.totalorder %s37, 0
      %s40 = sadd.s32 %s39, 1
      %s41 = scalar_select %p38, %s39, %s40
      %p44 = pneg %p38
      %p45 = scmp.eq.s32.totalorder %s15, 1
      %p46 = por %p44, %p45
      %p47 = scmp.ne.s32.totalorder %s39, %s42
      %p48 = scmp.eq.s32.totalorder %s15, 0
      %p49 = por %p47, %p48
      %p50 = scmp.ne.s32.totalorder %s39, %s42
      %p51 = scmp.eq.s32.totalorder %s20, 1
      %p52 = por %p50, %p51
      %p53 = scmp.ne.s32.totalorder %s42, %s43
      %p54 = scmp.eq.s32.totalorder %s20, 0
      %p55 = por %p53, %p54
      %p56 = scmp.ne.s32.totalorder %s42, %s43
      %p57 = scmp.eq.s32.totalorder %s21, 1
      %p58 = por %p56, %p57
      %p60 = scmp.ne.s32.totalorder %s43, %s59
      %p61 = scmp.eq.s32.totalorder %s21, 0
      %p62 = por %p60, %p61
      %s64 = sadd.s32 %s63, 1
      %p67 = scmp.eq.s32.totalorder %s15, 1
      %p68 = scmp.ne.s32.totalorder %s63, %s65
      %p69 = scmp.eq.s32.totalorder %s15, 0
      %p70 = por %p68, %p69
      %p71 = scmp.ne.s32.totalorder %s63, %s65
      %p72 = scmp.eq.s32.totalorder %s20, 1
      %p73 = por %p71, %p72
      %p74 = scmp.ne.s32.totalorder %s65, %s66
      %p75 = scmp.eq.s32.totalorder %s20, 0
      %p76 = por %p74, %p75
      %p77 = scmp.ne.s32.totalorder %s65, %s66
      %p78 = scmp.eq.s32.totalorder %s21, 1
      %p79 = por %p77, %p78
      %p81 = scmp.ne.s32.totalorder %s66, %s80
      %p82 = scmp.eq.s32.totalorder %s21, 0
      %p83 = por %p81, %p82
      %s85 = sadd.s32 %s84, 1
      %p88 = scmp.eq.s32.totalorder %s15, 1
      %p89 = scmp.ne.s32.totalorder %s84, %s86
      %p90 = scmp.eq.s32.totalorder %s15, 0
      %p91 = por %p89, %p90
      %p92 = scmp.ne.s32.totalorder %s84, %s86
      %p93 = scmp.eq.s32.totalorder %s20, 1
      %p94 = por %p92, %p93
      %p95 = scmp.ne.s32.totalorder %s86, %s87
      %p96 = scmp.eq.s32.totalorder %s20, 0
      %p97 = por %p95, %p96
      %p98 = scmp.ne.s32.totalorder %s86, %s87
      %p99 = scmp.eq.s32.totalorder %s21, 1
      %p100 = por %p98, %p99
      %p102 = scmp.ne.s32.totalorder %s87, %s101
      %p103 = scmp.eq.s32.totalorder %s21, 0
      %p104 = por %p102, %p103
      %s105 = ssub.s32 %s22, %s34
      %s106 = ssub.s32 %s23, %s30
      %s107 = sor.u32 %s105, %s106
      %p108 = scmp.eq.s32.totalorder %s107, 0
      %s110 = sadd.s32 %s109, 1
      %s111 = scalar_select %p108, %s109, %s110
      %p114 = pneg %p108
      %p115 = scmp.eq.s32.totalorder %s15, 1
      %p116 = por %p114, %p115
      %p117 = scmp.ne.s32.totalorder %s109, %s112
      %p118 = scmp.eq.s32.totalorder %s15, 0
      %p119 = por %p117, %p118
      %p120 = scmp.ne.s32.totalorder %s109, %s112
      %p121 = scmp.eq.s32.totalorder %s20, 1
      %p122 = por %p120, %p121
      %p123 = scmp.ne.s32.totalorder %s112, %s113
      %p124 = scmp.eq.s32.totalorder %s20, 0
      %p125 = por %p123, %p124
      %p126 = scmp.ne.s32.totalorder %s112, %s113
      %p127 = scmp.eq.s32.totalorder %s21, 1
      %p128 = por %p126, %p127
      %p130 = scmp.ne.s32.totalorder %s113, %s129
      %p131 = scmp.eq.s32.totalorder %s21, 0
      %p132 = por %p130, %p131
      %p133 = scmp.le.s32.totalorder 1, %s15
      %p134 = scmp.lt.s32.totalorder %s15, 3
      %p135 = pnand %p133, %p134
      %p136 = pneg %p135
      // Predicated region
      $region9: #{tpu_custom_call.1} parent=5 // pred_check
        _
      $region10: #{tpu_custom_call.1} parent=5 // pred_check_branch
        %138 = sbr.rel (%p135) target = $region12
      $region11: #{tpu_custom_call.1} parent=5 // pred_region
        %s139 = ssub.s32 %s15, 1
        // Predicated region
        $region13: #{tpu_custom_call.1} parent=11 // pred_check
          %p140 = pneg %p76
        $region14: #{tpu_custom_call.1} parent=11 // pred_check_branch
          %142 = sbr.rel (%p140) target = $region16
        $region15: #{tpu_custom_call.1} parent=11 // pred_region
          _
        $region16: #{tpu_custom_call.1} parent=11 // pred_fallthru
          _
        // Predicated region
        $region17: #{tpu_custom_call.1} parent=11 // pred_check
          %p143 = pneg %p97
        $region18: #{tpu_custom_call.1} parent=11 // pred_check_branch
          %145 = sbr.rel (%p143) target = $region20
        $region19: #{tpu_custom_call.1} parent=11 // pred_region
          _
        $region20: #{tpu_custom_call.1} parent=11 // pred_fallthru
          _
      $region12: #{tpu_custom_call.1} parent=5 // pred_fallthru
        _
      %p146 = scmp.lt.s32.totalorder %s15, 2
      // Predicated region
      $region21: #{tpu_custom_call.1} parent=5 // pred_check
        %p147 = pneg %p146
      $region22: #{tpu_custom_call.1} parent=5 // pred_check_branch
        %149 = sbr.rel (%p147) target = $region24
      $region23: #{tpu_custom_call.1} parent=5 // pred_region
        // Predicated region
        $region25: #{tpu_custom_call.1} parent=23 // pred_check
          %p150 = pneg %p49
        $region26: #{tpu_custom_call.1} parent=23 // pred_check_branch
          %152 = sbr.rel (%p150) target = $region28
        $region27: #{tpu_custom_call.1} parent=23 // pred_region
          %s153 = sand.u32 %s39, 1
          %s154 = scalar_lea.sflag [#allocation3], %s153
          %s155 = sand.u32 %s39, 1
          %s156 = smul.addr %s155, 32
          %s157 = scalar_lea.vmem [#allocation2], %s156
          %s159 = ssub.s32 512, 512
          %160 = vsyncadd %s154, %s159
          %s161 = smul.addr %s22, 4
          %s162 = sadd.s32 %s23, %s161
          %s163 = smul.addr %s162, 128
          %s164 = scalar_lea.hbm %s0, %s163
          %s165 = sshll.u32 %s157, 4
          %s166 = int_to_ptr.vmem [resolvable:$true] %s165
          %171 = dma.hbm_to_vmem [thread:$0]  %s164, 512, %s166, %s154, 128, 128, 8
        $region28: #{tpu_custom_call.1} parent=23 // pred_fallthru
          _
      $region24: #{tpu_custom_call.1} parent=5 // pred_fallthru
        _
      %p172 = scmp.le.s32.totalorder 1, %s15
      %p173 = scmp.lt.s32.totalorder %s15, 3
      %p174 = pnand %p172, %p173
      %p175 = pneg %p174
      // Predicated region
      $region29: #{tpu_custom_call.1} parent=5 // pred_check
        _
      $region30: #{tpu_custom_call.1} parent=5 // pred_check_branch
        %177 = sbr.rel (%p174) target = $region32
      $region31: #{tpu_custom_call.1} parent=5 // pred_region
        %s178 = ssub.s32 %s15, 1
        %s179 = sand.u32 %s42, 1
        %s180 = scalar_lea.sflag [#allocation3], %s179
        %s181 = sand.u32 %s42, 1
        %s182 = smul.addr %s181, 32
        %s183 = scalar_lea.vmem [#allocation2], %s182
        // Predicated region
        $region33: #{tpu_custom_call.1} parent=31 // pred_check
          %p184 = pneg %p55
        $region34: #{tpu_custom_call.1} parent=31 // pred_check_branch
          %186 = sbr.rel (%p184) target = $region36
        $region35: #{tpu_custom_call.1} parent=31 // pred_region
          %187 = dma.done %s180, 512
        $region36: #{tpu_custom_call.1} parent=31 // pred_fallthru
          _
        %s188 = sand.u32 %s42, 1
        %s189 = scalar_lea.sflag [#allocation3], %s188
        %s190 = sand.u32 %s42, 1
        %s191 = smul.addr %s190, 32
        %s192 = scalar_lea.vmem [#allocation2], %s191
        %p193 = pneg %p55
        %p194 = pneg %p52
        %p195 = pneg %p76
        %p196 = pneg %p73
        %p197 = pneg %p97
        %p198 = pneg %p94
        %p199 = pneg %p125
        %p200 = pneg %p122
        %s201 = sand.u32 %s112, 1
        %s202 = scalar_lea.sflag [#allocation4], %s201
        %s203 = sand.u32 %s112, 1
        %s204 = smul.addr %s203, 4
        %s205 = scalar_lea.vmem [#allocation5], %s204
        %v207 = vld [vmem:[%s1] sm:$0xf]
        %v208 = vld [vmem:[%s183] sm:$0xff]
        %v209 = vpack.c.bf16 %v208, %v208
        %vm210 = vcmask 64512
        %v212 = vsel %vm210, %v207, 0
        %vm214 = vcmask 1043456
        %v216 = vsel %vm214, %v209, 0
        %218 = vmatprep.subr.bf16.mxu0 0
        %219 = vmatpush1.bf16.msra.mxu0 %v216
        %220 = vmatprep.subr.bf16.mxu0 0
        %221 = vmatpush1.bf16.msra.mxu0 0
        %222 = vmatprep.subr.bf16.mxu0 0
        %223 = vmatpush1.bf16.msra.mxu0 0
        %224 = vmatprep.subr.bf16.mxu0 0
        %225 = vmatpush1.bf16.msra.mxu0 0
        %226 = vmatprep.subr.bf16.mxu0 0
        %227 = vmatpush1.bf16.msra.mxu0 0
        %228 = vmatprep.subr.bf16.mxu0 0
        %229 = vmatpush1.bf16.msra.mxu0 0
        %230 = vmatprep.subr.bf16.mxu0 0
        %231 = vmatpush1.bf16.msra.mxu0 0
        %232 = vmatprep.subr.bf16.mxu0 0
        %233 = vmatpush1.bf16.msra.mxu0 0
        %234 = vmatprep.subr.bf16.mxu0 0
        %235 = vmatpush1.bf16.msra.mxu0 0
        %236 = vmatprep.subr.bf16.mxu0 0
        %237 = vmatpush1.bf16.msra.mxu0 0
        %238 = vmatprep.subr.bf16.mxu0 0
        %239 = vmatpush1.bf16.msra.mxu0 0
        %240 = vmatprep.subr.bf16.mxu0 0
        %241 = vmatpush1.bf16.msra.mxu0 0
        %242 = vmatprep.subr.bf16.mxu0 0
        %243 = vmatpush1.bf16.msra.mxu0 0
        %244 = vmatprep.subr.bf16.mxu0 0
        %245 = vmatpush1.bf16.msra.mxu0 0
        %246 = vmatprep.subr.bf16.mxu0 0
        %247 = vmatpush1.bf16.msra.mxu0 0
        %248 = vmatprep.subr.bf16.mxu0 0
        %249 = vmatpush1.bf16.msra.mxu0 0
        %250 = vmatprep.mubr.bf16.mxu0 0
        %251 = vmatmul.mubr.bf16.gmra.mrb[0].mxu0 %v212
        %v252 = vpop.f32.mrb[0].mxu0
        %v253 = vadd.f32 0.0, %v252
        %v254 = vpop.f32.mrb[0].mxu0
        %v255 = vpop.f32.mrb[0].mxu0
        %v256 = vpop.f32.mrb[0].mxu0
        %257 = vdwg.mxu0
        %s258 = scalar_lea.vmem %s183, 8 [#allocation2]
        %v259 = vld [vmem:[%s258] sm:$0xff]
        %v260 = vpack.c.bf16 %v259, %v259
        %v262 = vsel %vm214, %v260, 0
        %264 = vmatprep.subr.bf16.mxu0 0
        %265 = vmatpush1.bf16.msra.mxu0 %v262
        %266 = vmatprep.subr.bf16.mxu0 0
        %267 = vmatpush1.bf16.msra.mxu0 0
        %268 = vmatprep.subr.bf16.mxu0 0
        %269 = vmatpush1.bf16.msra.mxu0 0
        %270 = vmatprep.subr.bf16.mxu0 0
        %271 = vmatpush1.bf16.msra.mxu0 0
        %272 = vmatprep.subr.bf16.mxu0 0
        %273 = vmatpush1.bf16.msra.mxu0 0
        %274 = vmatprep.subr.bf16.mxu0 0
        %275 = vmatpush1.bf16.msra.mxu0 0
        %276 = vmatprep.subr.bf16.mxu0 0
        %277 = vmatpush1.bf16.msra.mxu0 0
        %278 = vmatprep.subr.bf16.mxu0 0
        %279 = vmatpush1.bf16.msra.mxu0 0
        %280 = vmatprep.subr.bf16.mxu0 0
        %281 = vmatpush1.bf16.msra.mxu0 0
        %282 = vmatprep.subr.bf16.mxu0 0
        %283 = vmatpush1.bf16.msra.mxu0 0
        %284 = vmatprep.subr.bf16.mxu0 0
        %285 = vmatpush1.bf16.msra.mxu0 0
        %286 = vmatprep.subr.bf16.mxu0 0
        %287 = vmatpush1.bf16.msra.mxu0 0
        %288 = vmatprep.subr.bf16.mxu0 0
        %289 = vmatpush1.bf16.msra.mxu0 0
        %290 = vmatprep.subr.bf16.mxu0 0
        %291 = vmatpush1.bf16.msra.mxu0 0
        %292 = vmatprep.subr.bf16.mxu0 0
        %293 = vmatpush1.bf16.msra.mxu0 0
        %294 = vmatprep.subr.bf16.mxu0 0
        %295 = vmatpush1.bf16.msra.mxu0 0
        %296 = vmatprep.mubr.bf16.mxu0 0
        %297 = vmatmul.mubr.bf16.gmra.mrb[0].mxu0 %v212
        %v298 = vpop.f32.mrb[0].mxu0
        %v299 = vadd.f32 0.0, %v298
        %v300 = vpop.f32.mrb[0].mxu0
        %v301 = vpop.f32.mrb[0].mxu0
        %v302 = vpop.f32.mrb[0].mxu0
        %303 = vdwg.mxu0
        %v304 = vmax.f32 %v253, %v299
        %s305 = scalar_lea.vmem %s183, 16 [#allocation2]
        %v306 = vld [vmem:[%s305] sm:$0xff]
        %v307 = vpack.c.bf16 %v306, %v306
        %v309 = vsel %vm214, %v307, 0
        %311 = vmatprep.subr.bf16.mxu0 0
        %312 = vmatpush1.bf16.msra.mxu0 %v309
        %313 = vmatprep.subr.bf16.mxu0 0
        %314 = vmatpush1.bf16.msra.mxu0 0
        %315 = vmatprep.subr.bf16.mxu0 0
        %316 = vmatpush1.bf16.msra.mxu0 0
        %317 = vmatprep.subr.bf16.mxu0 0
        %318 = vmatpush1.bf16.msra.mxu0 0
        %319 = vmatprep.subr.bf16.mxu0 0
        %320 = vmatpush1.bf16.msra.mxu0 0
        %321 = vmatprep.subr.bf16.mxu0 0
        %322 = vmatpush1.bf16.msra.mxu0 0
        %323 = vmatprep.subr.bf16.mxu0 0
        %324 = vmatpush1.bf16.msra.mxu0 0
        %325 = vmatprep.subr.bf16.mxu0 0
        %326 = vmatpush1.bf16.msra.mxu0 0
        %327 = vmatprep.subr.bf16.mxu0 0
        %328 = vmatpush1.bf16.msra.mxu0 0
        %329 = vmatprep.subr.bf16.mxu0 0
        %330 = vmatpush1.bf16.msra.mxu0 0
        %331 = vmatprep.subr.bf16.mxu0 0
        %332 = vmatpush1.bf16.msra.mxu0 0
        %333 = vmatprep.subr.bf16.mxu0 0
        %334 = vmatpush1.bf16.msra.mxu0 0
        %335 = vmatprep.subr.bf16.mxu0 0
        %336 = vmatpush1.bf16.msra.mxu0 0
        %337 = vmatprep.subr.bf16.mxu0 0
        %338 = vmatpush1.bf16.msra.mxu0 0
        %339 = vmatprep.subr.bf16.mxu0 0
        %340 = vmatpush1.bf16.msra.mxu0 0
        %341 = vmatprep.subr.bf16.mxu0 0
        %342 = vmatpush1.bf16.msra.mxu0 0
        %343 = vmatprep.mubr.bf16.mxu0 0
        %344 = vmatmul.mubr.bf16.gmra.mrb[0].mxu0 %v212
        %v345 = vpop.f32.mrb[0].mxu0
        %v346 = vadd.f32 0.0, %v345
        %v347 = vpop.f32.mrb[0].mxu0
        %v348 = vpop.f32.mrb[0].mxu0
        %v349 = vpop.f32.mrb[0].mxu0
        %350 = vdwg.mxu0
        %v351 = vmax.f32 %v304, %v346
        %s352 = scalar_lea.vmem %s183, 24 [#allocation2]
        %v353 = vld [vmem:[%s352] sm:$0xff]
        %v354 = vpack.c.bf16 %v353, %v353
        %v356 = vsel %vm214, %v354, 0
        %358 = vmatprep.subr.bf16.mxu0 0
        %359 = vmatpush1.bf16.msra.mxu0 %v356
        %360 = vmatprep.subr.bf16.mxu0 0
        %361 = vmatpush1.bf16.msra.mxu0 0
        %362 = vmatprep.subr.bf16.mxu0 0
        %363 = vmatpush1.bf16.msra.mxu0 0
        %364 = vmatprep.subr.bf16.mxu0 0
        %365 = vmatpush1.bf16.msra.mxu0 0
        %366 = vmatprep.subr.bf16.mxu0 0
        %367 = vmatpush1.bf16.msra.mxu0 0
        %368 = vmatprep.subr.bf16.mxu0 0
        %369 = vmatpush1.bf16.msra.mxu0 0
        %370 = vmatprep.subr.bf16.mxu0 0
        %371 = vmatpush1.bf16.msra.mxu0 0
        %372 = vmatprep.subr.bf16.mxu0 0
        %373 = vmatpush1.bf16.msra.mxu0 0
        %374 = vmatprep.subr.bf16.mxu0 0
        %375 = vmatpush1.bf16.msra.mxu0 0
        %376 = vmatprep.subr.bf16.mxu0 0
        %377 = vmatpush1.bf16.msra.mxu0 0
        %378 = vmatprep.subr.bf16.mxu0 0
        %379 = vmatpush1.bf16.msra.mxu0 0
        %380 = vmatprep.subr.bf16.mxu0 0
        %381 = vmatpush1.bf16.msra.mxu0 0
        %382 = vmatprep.subr.bf16.mxu0 0
        %383 = vmatpush1.bf16.msra.mxu0 0
        %384 = vmatprep.subr.bf16.mxu0 0
        %385 = vmatpush1.bf16.msra.mxu0 0
        %386 = vmatprep.subr.bf16.mxu0 0
        %387 = vmatpush1.bf16.msra.mxu0 0
        %388 = vmatprep.subr.bf16.mxu0 0
        %389 = vmatpush1.bf16.msra.mxu0 0
        %390 = vmatprep.mubr.bf16.mxu0 0
        %391 = vmatmul.mubr.bf16.gmra.mrb[0].mxu0 %v212
        %v392 = vpop.f32.mrb[0].mxu0
        %v393 = vadd.f32 0.0, %v392
        %v394 = vpop.f32.mrb[0].mxu0
        %v395 = vpop.f32.mrb[0].mxu0
        %v396 = vpop.f32.mrb[0].mxu0
        %397 = vdwg.mxu0
        %v398 = vmax.f32 %v351, %v393
        %v399 = vld [vmem:[%s2] sm:$0xff]
        %401 = vset.pattern.permute.xlu0 0
        %402 = vperm.xlu0 %401, %v399
        %v403 = vpop.permute.xlu0 %402
        %v405 = vadd.f32 %v398, %v403
        %v406 = vpack.c.bf16 %v405, %v405
        %vm407 = vcmask 519168
        %408 = vst.msk [vmem:[%s205] sm:$0xf] %vm407, %v406
        %s409 = sand.u32 %s112, 1
        %s410 = scalar_lea.sflag [#allocation4], %s409
        %s411 = sand.u32 %s112, 1
        %s412 = smul.addr %s411, 4
        %s413 = scalar_lea.vmem [#allocation5], %s412
        // Predicated region
        $region37: #{tpu_custom_call.1} parent=31 // pred_check
          %p414 = pneg %p122
        $region38: #{tpu_custom_call.1} parent=31 // pred_check_branch
          %416 = sbr.rel (%p414) target = $region40
        $region39: #{tpu_custom_call.1} parent=31 // pred_region
          %s418 = ssub.s32 64, 64
          %419 = vsyncadd %s410, %s418
          %s420 = sadd.s32 %s25, %s24
          %s421 = smul.addr %s420, 64
          %s422 = scalar_lea.hbm %s3, %s421
          %s424 = sshll.u32 %s413, 4
          %s425 = int_to_ptr.vmem [resolvable:$true] %s424
          %427 = dma.vmem_to_hbm [thread:$0]  %s425, 64, %s422, %s410
        $region40: #{tpu_custom_call.1} parent=31 // pred_fallthru
          _
      $region32: #{tpu_custom_call.1} parent=5 // pred_fallthru
        _
      %p428 = scmp.le.s32.totalorder 2, %s15
      // Predicated region
      $region41: #{tpu_custom_call.1} parent=5 // pred_check
        %p429 = pneg %p428
      $region42: #{tpu_custom_call.1} parent=5 // pred_check_branch
        %431 = sbr.rel (%p429) target = $region44
      $region43: #{tpu_custom_call.1} parent=5 // pred_region
        %s432 = ssub.s32 %s15, 2
        // Predicated region
        $region45: #{tpu_custom_call.1} parent=43 // pred_check
          %p433 = pneg %p128
        $region46: #{tpu_custom_call.1} parent=43 // pred_check_branch
          %435 = sbr.rel (%p433) target = $region48
        $region47: #{tpu_custom_call.1} parent=43 // pred_region
          %s436 = sand.u32 %s113, 1
          %s437 = scalar_lea.sflag [#allocation4], %s436
          %s438 = sand.u32 %s113, 1
          %s439 = smul.addr %s438, 4
          %s440 = scalar_lea.vmem [#allocation5], %s439
          %441 = dma.done %s437, 64
        $region48: #{tpu_custom_call.1} parent=43 // pred_fallthru
          _
      $region44: #{tpu_custom_call.1} parent=5 // pred_fallthru
        _
    $region6: #{tpu_custom_call.1} parent=1 // loop_footer
      %s19 = sadd.s32 1, %s15
    $region7: #{tpu_custom_call.1} parent=1 // loop_footer_branch
      %14 = sbr.rel target = $region3
    $region8: #{tpu_custom_call.1} parent=1 // loop_exit
      _
    %442 = vsyncpa [#allocation3], 1
    %s443 = scalar_lea.sflag [#allocation3], 1
    %444 = vsyncpa %s443, 1
    %445 = vsyncpa [#allocation4], 1
    %s446 = scalar_lea.sflag [#allocation4], 1
    %447 = vsyncpa %s446, 1

</llo_original>
